<compile_context>
chip_gen: v5e
topology: v5e:2x2
jax: 0.10.0
libtpu: 0.0.40
codegen_flags: <defaults>
</compile_context>

<pallas_src>
import functools

import jax
import jax.numpy as jnp
from jax.experimental import pallas as pl
from jax.experimental.pallas import tpu as pltpu

_SUBLANES = 8


def _round_up(x, m):
    return (x + m - 1) // m * m


def _vmem_budget():
    """(single-buffer in+out byte budget, vmem_limit_bytes), generation-aware."""
    try:
        cap = pltpu.get_tpu_info().vmem_capacity_bytes
    except Exception:  # conservative fallback if the query is unavailable
        cap = 64 * 1024 * 1024
    if cap >= 100 * 1024 * 1024:          # v5e / v6e: 128 MiB physical VMEM
        return 12 * 1024 * 1024, 64 * 1024 * 1024
    # v7x: 64 MiB physical per TensorCore -> smaller blocks, headroom under the limit
    return 8 * 1024 * 1024, 48 * 1024 * 1024


def _choose_tile_h(oh, W, ow, kh, budget_bytes, user_tile_h=None):
    """Pick the row-tile height.

    Big enough to sit at the HBM streaming roofline, small enough that the
    double-buffered in+out blocks fit the per-generation VMEM budget, balanced
    across the grid (waste < 8 rows), and capped so there are >= 2 grid steps
    when oh >= 16 (so the "parallel" axis uses both v7x TensorCores).
    """
    itemsize = 4
    bytes_per_row = (kh * W + ow) * itemsize
    vmem_cap_rows = max(_SUBLANES,
                        (budget_bytes // max(1, bytes_per_row)) // _SUBLANES * _SUBLANES)

    if user_tile_h is not None:
        tile_h = _round_up(max(1, int(user_tile_h)), _SUBLANES)
        tile_h = min(tile_h, vmem_cap_rows)          # re-validate vs the VMEM budget
        if tile_h >= oh:
            return oh, 1                             # full-height block (full dim: legal)
        return tile_h, pl.cdiv(oh, tile_h)

    cap = min(vmem_cap_rows, 4096)
    if oh >= 2 * _SUBLANES:
        # Guarantee >= 2 grid steps so v7x's two TensorCores both get work
        # (neutral on single-TC v5e/v6e: one extra ~0.35 us grid step).
        cap = min(cap, _round_up(pl.cdiv(oh, 2), _SUBLANES))
    if cap >= oh:
        return oh, 1
    n_tiles = pl.cdiv(oh, cap)
    tile_h = _round_up(pl.cdiv(oh, n_tiles), _SUBLANES)   # balanced tiles
    return tile_h, pl.cdiv(oh, tile_h)


def _corr2d_kernel(kh, kw, *refs):
    """One output row tile: Y[i,j] = bias + sum_{di,dj} W[di,dj] * X[i+di, j+dj].

    refs = (x_shift_0, ..., x_shift_{kh-1}, weight_smem, bias_smem, y).
    x_shift_di is the input stream already shifted by di rows, so every tap is a
    static ref-slice load of the current block (Mosaic fuses the shifted load into
    the FMA stream; no full-tile realignment/copy pass).
    """
    x_refs = refs[:kh]
    w_ref, b_ref, y_ref = refs[kh], refs[kh + 1], refs[kh + 2]
    th, ow = y_ref.shape
    # Bias fused into the accumulator init: saves one full-tile VPU add pass.
    acc = jnp.full((th, ow), b_ref[0], dtype=jnp.float32)
    # kh, kw are static Python ints -> fully unrolled tap loop (kh*kw is tiny here).
    for di in range(kh):
        for dj in range(kw):
            acc = acc + w_ref[di * kw + dj] * x_refs[di][:, dj:dj + ow]
    y_ref[...] = acc.astype(y_ref.dtype)


def conv2d_forward(x, weight, bias, *, tile_h=None):
    """Pallas equivalent of Conv2D.forward: corr2d(x, weight) + bias."""
    H, W = x.shape
    kh, kw = weight.shape
    oh, ow = H - kh + 1, W - kw + 1
    if oh <= 0 or ow <= 0:
        raise ValueError(f"kernel {tuple(weight.shape)} does not fit input {tuple(x.shape)}")

    budget_bytes, vmem_limit = _vmem_budget()
    tile_h, n_tiles = _choose_tile_h(oh, W, ow, kh, budget_bytes, tile_h)

    x_f32 = x.astype(jnp.float32)
    # Row-shifted, full-width views of X. For the module's kh == 1 this is X itself:
    # zero extra copies, zero padding -- the kernel's 1 read + 1 write is the only
    # image HBM traffic. For kh > 1 each shift is a cheap row slice.
    # TODO(synk): for multi-channel / large kh*kw filters switch to an im2col /
    # shifted-slab MXU matmul (tile N/K to 128 on v5e, 256 on v6e/v7x) instead of
    # kh shifted VPU tap streams.
    xs = [x_f32] if kh == 1 else [x_f32[di:di + oh, :] for di in range(kh)]
    w_flat = weight.reshape(-1).astype(jnp.float32)       # 1-D SMEM: no [8,128]-word pad
    b_flat = jnp.reshape(bias, (-1,)).astype(jnp.float32)

    kernel = functools.partial(_corr2d_kernel, kh, kw)
    row_block = lambda i: (i, 0)

    return pl.pallas_call(
        kernel,
        out_shape=jax.ShapeDtypeStruct((oh, ow), jnp.float32),
        grid=(n_tiles,),
        in_specs=(
            # X row tiles: full array width (== W) so no width padding is needed.
            [pl.BlockSpec((tile_h, W), row_block) for _ in range(kh)]
            + [pl.BlockSpec(memory_space=pltpu.MemorySpace.SMEM),   # weight (kh*kw,) scalars
               pl.BlockSpec(memory_space=pltpu.MemorySpace.SMEM)]   # bias (1,) scalar
        ),
        # Output emitted UNPADDED (last dim == full ow); edge/partial blocks are
        # masked by Pallas, so no y[:oh, :ow] slice copy in the wrapper.
        out_specs=pl.BlockSpec((tile_h, ow), row_block),
        compiler_params=pltpu.CompilerParams(
            dimension_semantics=("parallel",),   # independent row tiles (v7x: both TCs)
            vmem_limit_bytes=vmem_limit,         # generation-aware budget
        ),
    )(*xs, w_flat, b_flat)


def _corr2d_ref(X, K):
    """Pure-JAX reference mirroring the PyTorch corr2d loop."""
    kh, kw = K.shape
    oh, ow = X.shape[0] - kh + 1, X.shape[1] - kw + 1
    out = jnp.zeros((oh, ow), jnp.float32)
    for di in range(kh):
        for dj in range(kw):
            out = out + K[di, dj] * X[di:di + oh, dj:dj + ow]
    return out


if __name__ == "__main__":
    key = jax.random.PRNGKey(0)
    k_x, k_w, k_x2, k_x3, k_w3, k_b3 = jax.random.split(key, 6)

    # --- Case 1: mirrors the reference script exactly ---
    #   X = torch.triu(X);  K = [[1.0, -1.0]];  bias initialized to zeros.
    H, W = 16, 16
    X = jnp.triu(jax.random.normal(k_x, (H, W), dtype=jnp.float32))
    K = jnp.array([[1.0, -1.0]], dtype=jnp.float32)
    bias = jnp.zeros((1,), dtype=jnp.float32)

    y = jax.block_until_ready(conv2d_forward(X, K, bias))
    y_ref = _corr2d_ref(X, K) + bias[0]
    assert y.shape == (H, W - 1)
    assert jnp.allclose(y, y_ref, atol=1e-5, rtol=1e-5)

    # --- Case 2: larger image, explicit small tile_h -> multi-step pipelined grid ---
    H2, W2 = 64, 200
    X2 = jax.random.normal(k_x2, (H2, W2), dtype=jnp.float32)
    weight2 = jax.random.normal(k_w, (1, 2), dtype=jnp.float32)   # nn.Parameter(torch.randn(kernel_size))
    bias2 = jnp.zeros((1,), dtype=jnp.float32)                    # nn.Parameter(torch.zeros(1))

    y2 = jax.block_until_ready(conv2d_forward(X2, weight2, bias2, tile_h=16))
    y2_ref = _corr2d_ref(X2, weight2) + bias2[0]
    assert y2.shape == (H2, W2 - 1)
    assert jnp.allclose(y2, y2_ref, atol=1e-4, rtol=1e-4)

    # --- Case 3: general kernel_size (2x3), nonzero bias, odd shapes ---
    # Exercises the balanced-tile path with a masked partial last row block
    # (no wrapper padding, no output slicing).
    H3, W3 = 37, 53
    X3 = jax.random.normal(k_x3, (H3, W3), dtype=jnp.float32)
    K3 = jax.random.normal(k_w3, (2, 3), dtype=jnp.float32)
    b3 = jax.random.normal(k_b3, (1,), dtype=jnp.float32)

    y3 = jax.block_until_ready(conv2d_forward(X3, K3, b3))
    y3_ref = _corr2d_ref(X3, K3) + b3[0]
    assert y3.shape == (H3 - 1, W3 - 2)
    assert jnp.allclose(y3, y3_ref, atol=1e-4, rtol=1e-4)

    print("KERNEL_OK")
</pallas_src>

<mosaic_0001>
module attributes {stable_mosaic.version = 11 : i64} {
  func.func @_corr2d_kernel(%arg0: i32, %arg1: memref<8x16xf32, #tpu.memory_space<vmem>>, %arg2: memref<2xf32, #tpu.memory_space<smem>>, %arg3: memref<1xf32, #tpu.memory_space<smem>>, %arg4: memref<8x15xf32, #tpu.memory_space<vmem>>) attributes {dimension_semantics = [#tpu.dimension_semantics<parallel>], iteration_bounds = array<i64: 2>, scalar_prefetch = 0 : i64, scratch_operands = 0 : i64, tpu.core_type = #tpu.core_type<tc>, window_params = [{transform_indices = @transform_0, window_bounds = array<i64: 8, 16>}, {transform_indices = @transform_1, window_bounds = array<i64: 2>}, {transform_indices = @transform_2, window_bounds = array<i64: 1>}, {transform_indices = @transform_3, window_bounds = array<i64: 8, 15>}]} {
    %c0 = arith.constant 0 : index
    %0 = memref.load %arg3[%c0] : memref<1xf32, #tpu.memory_space<smem>>
    %1 = vector.broadcast %0 : f32 to vector<8x15xf32>
    %c0_0 = arith.constant 0 : index
    %2 = memref.load %arg2[%c0_0] : memref<2xf32, #tpu.memory_space<smem>>
    %c0_1 = arith.constant 0 : index
    %c0_2 = arith.constant 0 : index
    %3 = vector.load %arg1[%c0_1, %c0_2] : memref<8x16xf32, #tpu.memory_space<vmem>>, vector<8x15xf32>
    %4 = vector.broadcast %2 : f32 to vector<8x15xf32>
    %5 = arith.mulf %4, %3 : vector<8x15xf32>
    %6 = arith.addf %1, %5 : vector<8x15xf32>
    %c1 = arith.constant 1 : index
    %7 = memref.load %arg2[%c1] : memref<2xf32, #tpu.memory_space<smem>>
    %c0_3 = arith.constant 0 : index
    %c1_4 = arith.constant 1 : index
    %8 = vector.load %arg1[%c0_3, %c1_4] : memref<8x16xf32, #tpu.memory_space<vmem>>, vector<8x15xf32>
    %9 = vector.broadcast %7 : f32 to vector<8x15xf32>
    %10 = arith.mulf %9, %8 : vector<8x15xf32>
    %11 = arith.addf %6, %10 : vector<8x15xf32>
    %c0_5 = arith.constant 0 : index
    %c0_6 = arith.constant 0 : index
    %12 = vector.load %arg4[%c0_5, %c0_6] : memref<8x15xf32, #tpu.memory_space<vmem>>, vector<8x15xf32>
    tpu.vector_store %arg4[%c0_5, %c0_6], %11 {strides = array<i32>} : memref<8x15xf32, #tpu.memory_space<vmem>>, vector<8x15xf32>,
    return
  }
  func.func @transform_0(%arg0: i32) -> (i32, i32) {
    %c0_i32 = arith.constant 0 : i32
    %c0_i32_0 = arith.constant 0 : i32
    return %arg0, %c0_i32 : i32, i32
  }
  func.func @transform_1(%arg0: i32) -> i32 {
    %c0_i32 = arith.constant 0 : i32
    %c0_i32_0 = arith.constant 0 : i32
    return %c0_i32 : i32
  }
  func.func @transform_2(%arg0: i32) -> i32 {
    %c0_i32 = arith.constant 0 : i32
    %c0_i32_0 = arith.constant 0 : i32
    return %c0_i32 : i32
  }
  func.func @transform_3(%arg0: i32) -> (i32, i32) {
    %c0_i32 = arith.constant 0 : i32
    %c0_i32_0 = arith.constant 0 : i32
    return %arg0, %c0_i32 : i32, i32
  }
}

</mosaic_0001>

<llo_original>
// kernel: tpu_custom_call.1
$region0: #{tpu_custom_call.1}
  #allocation0 [shape = 'u32[]', space=smem, size = 0x4, offset = 0x4, fixed_abs, tag = 'smem constant byte address 0x4 - core index']
  #allocation1 [shape = 'u32[72,128]{1,0:T(1,128)}', space=vmem, size = 0x9000, scoped, tag = 'internal scratch']
  #allocation2 [shape = 'f32[1]{0:T(128)S(6)}', space=smem, size = 0x200, scoped, tag = 'scoped memory for tpu_custom_call.1']
  %s0 = inlined_call_operand.hbm [shape: f32[16,16], index: 0, kind: input, shape index: {}]
  %s1 = inlined_call_operand.vmem [shape: f32[2], index: 1, kind: input, shape index: {}]
  %s2 = inlined_call_operand.<no memory space> [shape: f32[1], index: 2, kind: input, shape index: {}]
  %s3 = inlined_call_operand.hbm [shape: f32[16,15], index: 3, kind: output, shape index: {}]
  %s4 = sld [smem:[#allocation0]]
  $region53: #{tpu_custom_call.1} parent=0
    _
  %s6 = ssub.s32 1, %s4
  %s7 = scalar_select 0, %s6, %s4
  %8 = sst [smem:[#allocation2]] %s2
  $region1: #{tpu_custom_call.1} parent=0
    #allocation3 [shape = 'u8[8192]{0}', space=vmem, size = 0x2000, scoped, tag = 'input window, operand 0']
    #allocation4 [shape = 's32[2]{0}', space=sflag, size = 0x8, scoped, tag = 'scoped memory for tpu_custom_call.1']
    #allocation5 [shape = 's32[2]{0}', space=sflag, size = 0x8, scoped, tag = 'scoped memory for tpu_custom_call.1']
    #allocation6 [shape = 's32[2]{0}', space=sflag, size = 0x8, scoped, tag = 'scoped memory for tpu_custom_call.1']
    #allocation7 [shape = 'u8[512]{0}', space=smem, size = 0x200, scoped, tag = 'input window, operand 1, single buffered']
    #allocation8 [shape = 'u8[8192]{0}', space=vmem, size = 0x2000, scoped, tag = 'output window, operand 0']
    %9 = vsyncpa [#allocation4], 0
    %s10 = scalar_lea.sflag [#allocation4], 1
    %11 = vsyncpa %s10, 0
    %12 = vsyncpa [#allocation6], 0
    %13 = vsyncpa [#allocation5], 0
    %s14 = scalar_lea.sflag [#allocation5], 1
    %15 = vsyncpa %s14, 0
    loop: start=0, step=1, limit=4
    $region2: #{tpu_custom_call.1} parent=1 // loop_pre_header
      _
    $region3: #{tpu_custom_call.1} parent=1 // loop_header
      %s17 = sphi 0, %s21
      %p18 = scmp.ge.s32.totalorder %s17, 4
      %s27 = sphi 0, %s29
      %s30 = sphi 0, %s27
      %s31 = sphi 0, %s30
      %s47 = sphi 0, %s31
      %s51 = sphi 0, %s51
      %s53 = sphi 0, %s51
      %s54 = sphi 0, %s53
      %s68 = sphi 0, %s54
      %s72 = sphi 0, %s72
      %s74 = sphi 0, %s72
      %s75 = sphi 0, %s74
      %s89 = sphi 0, %s75
      %s95 = sphi 0, %s97
      %s98 = sphi 0, %s95
      %s99 = sphi 0, %s98
      %s115 = sphi 0, %s99
    $region4: #{tpu_custom_call.1} parent=1 // loop_header_branch
      %20 = sbr.rel (%p18) target = $region8
    $region5: #{tpu_custom_call.1} parent=1 // loop_body
      %s22 = ssub.s32 %s17, 1
      %s23 = ssub.s32 %s17, 2
      %s24 = sadd.s32 %s17, 1
      %s25 = ssub.s32 %s17, %s24
      %p26 = scmp.eq.s32.totalorder %s25, 0
      %s28 = sadd.s32 %s27, 1
      %s29 = scalar_select %p26, %s27, %s28
      %p32 = pneg %p26
      %p33 = scmp.eq.s32.totalorder %s17, 1
      %p34 = por %p32, %p33
      %p35 = scmp.ne.s32.totalorder %s27, %s30
      %p36 = scmp.eq.s32.totalorder %s17, 0
      %p37 = por %p35, %p36
      %p38 = scmp.ne.s32.totalorder %s27, %s30
      %p39 = scmp.eq.s32.totalorder %s22, 1
      %p40 = por %p38, %p39
      %p41 = scmp.ne.s32.totalorder %s30, %s31
      %p42 = scmp.eq.s32.totalorder %s22, 0
      %p43 = por %p41, %p42
      %p44 = scmp.ne.s32.totalorder %s30, %s31
      %p45 = scmp.eq.s32.totalorder %s23, 1
      %p46 = por %p44, %p45
      %p48 = scmp.ne.s32.totalorder %s31, %s47
      %p49 = scmp.eq.s32.totalorder %s23, 0
      %p50 = por %p48, %p49
      %s52 = sadd.s32 %s51, 1
      %p55 = scmp.eq.s32.totalorder %s17, 1
      %p56 = scmp.ne.s32.totalorder %s51, %s53
      %p57 = scmp.eq.s32.totalorder %s17, 0
      %p58 = por %p56, %p57
      %p59 = scmp.ne.s32.totalorder %s51, %s53
      %p60 = scmp.eq.s32.totalorder %s22, 1
      %p61 = por %p59, %p60
      %p62 = scmp.ne.s32.totalorder %s53, %s54
      %p63 = scmp.eq.s32.totalorder %s22, 0
      %p64 = por %p62, %p63
      %p65 = scmp.ne.s32.totalorder %s53, %s54
      %p66 = scmp.eq.s32.totalorder %s23, 1
      %p67 = por %p65, %p66
      %p69 = scmp.ne.s32.totalorder %s54, %s68
      %p70 = scmp.eq.s32.totalorder %s23, 0
      %p71 = por %p69, %p70
      %s73 = sadd.s32 %s72, 1
      %p76 = scmp.eq.s32.totalorder %s17, 1
      %p77 = scmp.ne.s32.totalorder %s72, %s74
      %p78 = scmp.eq.s32.totalorder %s17, 0
      %p79 = por %p77, %p78
      %p80 = scmp.ne.s32.totalorder %s72, %s74
      %p81 = scmp.eq.s32.totalorder %s22, 1
      %p82 = por %p80, %p81
      %p83 = scmp.ne.s32.totalorder %s74, %s75
      %p84 = scmp.eq.s32.totalorder %s22, 0
      %p85 = por %p83, %p84
      %p86 = scmp.ne.s32.totalorder %s74, %s75
      %p87 = scmp.eq.s32.totalorder %s23, 1
      %p88 = por %p86, %p87
      %p90 = scmp.ne.s32.totalorder %s75, %s89
      %p91 = scmp.eq.s32.totalorder %s23, 0
      %p92 = por %p90, %p91
      %s93 = ssub.s32 %s17, %s24
      %p94 = scmp.eq.s32.totalorder %s93, 0
      %s96 = sadd.s32 %s95, 1
      %s97 = scalar_select %p94, %s95, %s96
      %p100 = pneg %p94
      %p101 = scmp.eq.s32.totalorder %s17, 1
      %p102 = por %p100, %p101
      %p103 = scmp.ne.s32.totalorder %s95, %s98
      %p104 = scmp.eq.s32.totalorder %s17, 0
      %p105 = por %p103, %p104
      %p106 = scmp.ne.s32.totalorder %s95, %s98
      %p107 = scmp.eq.s32.totalorder %s22, 1
      %p108 = por %p106, %p107
      %p109 = scmp.ne.s32.totalorder %s98, %s99
      %p110 = scmp.eq.s32.totalorder %s22, 0
      %p111 = por %p109, %p110
      %p112 = scmp.ne.s32.totalorder %s98, %s99
      %p113 = scmp.eq.s32.totalorder %s23, 1
      %p114 = por %p112, %p113
      %p116 = scmp.ne.s32.totalorder %s99, %s115
      %p117 = scmp.eq.s32.totalorder %s23, 0
      %p118 = por %p116, %p117
      %p119 = scmp.le.s32.totalorder 1, %s17
      %p120 = scmp.lt.s32.totalorder %s17, 3
      %p121 = pnand %p119, %p120
      %p122 = pneg %p121
      // Predicated region
      $region9: #{tpu_custom_call.1} parent=5 // pred_check
        _
      $region10: #{tpu_custom_call.1} parent=5 // pred_check_branch
        %124 = sbr.rel (%p121) target = $region12
      $region11: #{tpu_custom_call.1} parent=5 // pred_region
        %s125 = ssub.s32 %s17, 1
        // Predicated region
        $region13: #{tpu_custom_call.1} parent=11 // pred_check
          %p126 = pneg %p64
        $region14: #{tpu_custom_call.1} parent=11 // pred_check_branch
          %128 = sbr.rel (%p126) target = $region16
        $region15: #{tpu_custom_call.1} parent=11 // pred_region
          %130 = vsyncadd [#allocation6], 0
          %s132 = sshll.u32 %s1, 4
          %s133 = int_to_ptr.vmem [resolvable:$true] %s132
          %135 = dma.vmem_to_smem %s133, 16, [#allocation7], [#allocation6]
        $region16: #{tpu_custom_call.1} parent=11 // pred_fallthru
          _
        // Predicated region
        $region17: #{tpu_custom_call.1} parent=11 // pred_check
          %p136 = pneg %p85
        $region18: #{tpu_custom_call.1} parent=11 // pred_check_branch
          %138 = sbr.rel (%p136) target = $region20
        $region19: #{tpu_custom_call.1} parent=11 // pred_region
          _
        $region20: #{tpu_custom_call.1} parent=11 // pred_fallthru
          _
      $region12: #{tpu_custom_call.1} parent=5 // pred_fallthru
        _
      %p139 = scmp.lt.s32.totalorder %s17, 2
      // Predicated region
      $region21: #{tpu_custom_call.1} parent=5 // pred_check
        %p140 = pneg %p139
      $region22: #{tpu_custom_call.1} parent=5 // pred_check_branch
        %142 = sbr.rel (%p140) target = $region24
      $region23: #{tpu_custom_call.1} parent=5 // pred_region
        // Predicated region
        $region25: #{tpu_custom_call.1} parent=23 // pred_check
          %p143 = pneg %p37
        $region26: #{tpu_custom_call.1} parent=23 // pred_check_branch
          %145 = sbr.rel (%p143) target = $region28
        $region27: #{tpu_custom_call.1} parent=23 // pred_region
          %s146 = sand.u32 %s27, 1
          %s147 = scalar_lea.sflag [#allocation4], %s146
          %s148 = sand.u32 %s27, 1
          %s149 = smul.addr %s148, 8
          %s150 = scalar_lea.vmem [#allocation3], %s149
          %152 = vsyncadd %s147, 0
          %s153 = smul.addr %s17, 8
          %s154 = scalar_lea.hbm %s0, %s153
          %s156 = sshll.u32 %s154, 4
          %s157 = int_to_ptr.hbm [resolvable:$true] %s156
          %s158 = sshll.u32 %s150, 4
          %s159 = int_to_ptr.vmem [resolvable:$true] %s158
          %161 = dma.hbm_to_vmem [thread:$0]  %s157, 128, %s159, %s147
        $region28: #{tpu_custom_call.1} parent=23 // pred_fallthru
          _
      $region24: #{tpu_custom_call.1} parent=5 // pred_fallthru
        _
      %p162 = scmp.le.s32.totalorder 1, %s17
      %p163 = scmp.lt.s32.totalorder %s17, 3
      %p164 = pnand %p162, %p163
      %p165 = pneg %p164
      // Predicated region
      $region29: #{tpu_custom_call.1} parent=5 // pred_check
        _
      $region30: #{tpu_custom_call.1} parent=5 // pred_check_branch
        %167 = sbr.rel (%p164) target = $region32
      $region31: #{tpu_custom_call.1} parent=5 // pred_region
        %s168 = ssub.s32 %s17, 1
        %s169 = sand.u32 %s30, 1
        %s170 = scalar_lea.sflag [#allocation4], %s169
        %s171 = sand.u32 %s30, 1
        %s172 = smul.addr %s171, 8
        %s173 = scalar_lea.vmem [#allocation3], %s172
        // Predicated region
        $region33: #{tpu_custom_call.1} parent=31 // pred_check
          %p174 = pneg %p43
        $region34: #{tpu_custom_call.1} parent=31 // pred_check_branch
          %176 = sbr.rel (%p174) target = $region36
        $region35: #{tpu_custom_call.1} parent=31 // pred_region
          %178 = dma.done %s170, 128
        $region36: #{tpu_custom_call.1} parent=31 // pred_fallthru
          _
        // Predicated region
        $region37: #{tpu_custom_call.1} parent=31 // pred_check
          %p179 = pneg %p64
        $region38: #{tpu_custom_call.1} parent=31 // pred_check_branch
          %181 = sbr.rel (%p179) target = $region40
        $region39: #{tpu_custom_call.1} parent=31 // pred_region
          %183 = dma.done [#allocation6], 16
        $region40: #{tpu_custom_call.1} parent=31 // pred_fallthru
          _
        %184 = sfence
        %s185 = sand.u32 %s30, 1
        %s186 = scalar_lea.sflag [#allocation4], %s185
        %s187 = sand.u32 %s30, 1
        %s188 = smul.addr %s187, 8
        %s189 = scalar_lea.vmem [#allocation3], %s188
        %p190 = pneg %p43
        %p191 = pneg %p40
        %p192 = pneg %p64
        %p193 = pneg %p61
        %p194 = pneg %p85
        %p195 = pneg %p82
        %p196 = pneg %p111
        %p197 = pneg %p108
        %s198 = sand.u32 %s98, 1
        %s199 = scalar_lea.sflag [#allocation5], %s198
        %s200 = sand.u32 %s98, 1
        %s201 = smul.addr %s200, 8
        %s202 = scalar_lea.vmem [#allocation8], %s201
        %s203 = sld [smem:[#allocation2]]
        %v204 = vstv %s203
        %s205 = sld [smem:[#allocation7]]
        %v206 = vld [vmem:[%s173] sm:$0xff]
        %v207 = vstv %s205
        %v208 = vmul.f32 %v207, %v206
        %v209 = vadd.f32 %v204, %v208
        %s210 = sld [smem:[#allocation7 + $0x1]]
        %v211 = vstv %s210
        %v212 = vmul.f32 %v211, %v206
        %214 = vrot.lane.b32.xlu0 %v212, 127
        %v215 = vpop.permute.xlu0 %214
        %v217 = vadd.f32 %v209, %v215
        %vm218 = vcmask 121856
        %219 = vst.msk [vmem:[%s202] sm:$0xff] %vm218, %v217
        %s220 = sand.u32 %s98, 1
        %s221 = scalar_lea.sflag [#allocation5], %s220
        %s222 = sand.u32 %s98, 1
        %s223 = smul.addr %s222, 8
        %s224 = scalar_lea.vmem [#allocation8], %s223
        // Predicated region
        $region41: #{tpu_custom_call.1} parent=31 // pred_check
          %p225 = pneg %p108
        $region42: #{tpu_custom_call.1} parent=31 // pred_check_branch
          %227 = sbr.rel (%p225) target = $region44
        $region43: #{tpu_custom_call.1} parent=31 // pred_region
          %229 = vsyncadd %s221, 0
          %s230 = smul.addr %s22, 8
          %s231 = scalar_lea.hbm %s3, %s230
          %s233 = sshll.u32 %s224, 4
          %s234 = int_to_ptr.vmem [resolvable:$true] %s233
          %s235 = sshll.u32 %s231, 4
          %s236 = int_to_ptr.hbm [resolvable:$true] %s235
          %238 = dma.vmem_to_hbm [thread:$0]  %s234, 128, %s236, %s221
        $region44: #{tpu_custom_call.1} parent=31 // pred_fallthru
          _
      $region32: #{tpu_custom_call.1} parent=5 // pred_fallthru
        _
      %p239 = scmp.le.s32.totalorder 2, %s17
      // Predicated region
      $region45: #{tpu_custom_call.1} parent=5 // pred_check
        %p240 = pneg %p239
      $region46: #{tpu_custom_call.1} parent=5 // pred_check_branch
        %242 = sbr.rel (%p240) target = $region48
      $region47: #{tpu_custom_call.1} parent=5 // pred_region
        %s243 = ssub.s32 %s17, 2
        // Predicated region
        $region49: #{tpu_custom_call.1} parent=47 // pred_check
          %p244 = pneg %p114
        $region50: #{tpu_custom_call.1} parent=47 // pred_check_branch
          %246 = sbr.rel (%p244) target = $region52
        $region51: #{tpu_custom_call.1} parent=47 // pred_region
          %s247 = sand.u32 %s99, 1
          %s248 = scalar_lea.sflag [#allocation5], %s247
          %s249 = sand.u32 %s99, 1
          %s250 = smul.addr %s249, 8
          %s251 = scalar_lea.vmem [#allocation8], %s250
          %253 = dma.done %s248, 128
        $region52: #{tpu_custom_call.1} parent=47 // pred_fallthru
          _
      $region48: #{tpu_custom_call.1} parent=5 // pred_fallthru
        _
    $region6: #{tpu_custom_call.1} parent=1 // loop_footer
      %s21 = sadd.s32 1, %s17
    $region7: #{tpu_custom_call.1} parent=1 // loop_footer_branch
      %16 = sbr.rel target = $region3
    $region8: #{tpu_custom_call.1} parent=1 // loop_exit
      _
    %254 = vsyncpa [#allocation4], 1
    %s255 = scalar_lea.sflag [#allocation4], 1
    %256 = vsyncpa %s255, 1
    %257 = vsyncpa [#allocation5], 1
    %s258 = scalar_lea.sflag [#allocation5], 1
    %259 = vsyncpa %s258, 1
    %260 = vsyncpa [#allocation6], 1
    %s261 = scalar_lea.sflag [#allocation6], 1
    %262 = vsyncpa %s261, 1

</llo_original>
